<compile_context>
chip_gen: v7x
topology: tpu7x:2x2x1
jax: 0.10.0
libtpu: 0.0.40
codegen_flags: <defaults>
</compile_context>

<pallas_src>
import functools

import jax
import jax.numpy as jnp
from jax.experimental import pallas as pl
from jax.experimental.pallas import tpu as pltpu


def _round_up(x, m):
    return ((x + m - 1) // m) * m


def _int_pow(x, p):
    """x**p without the exp/log EUP path for small integer powers."""
    p = float(p)
    if p == 1.0:
        return x
    if p.is_integer() and 2 <= p <= 8:
        r = x
        for _ in range(int(p) - 1):
            r = r * x
        return r
    # TODO(synk): true fractional / large powers fall back to pow (EUP exp+log).
    return x ** p


# ----------------------------- Pallas kernel -------------------------------
def _supcon_kernel(*refs, block_a, block_n, inv_temp, n_valid,
                   pos_weight_mode, sim_power, explicit_mask):
    if explicit_mask:
        (mask_ref, anchor_ref, contrast_ref,
         loss_ref, m_sc, l_sc, ws_sc, wl_sc) = refs
    else:
        (row_id_ref, col_id_ref, anchor_ref, contrast_ref,
         loss_ref, m_sc, l_sc, ws_sc, wl_sc) = refs

    i = pl.program_id(0)          # anchor-tile index   (parallel)
    k = pl.program_id(1)          # contrast-tile index (reduction)
    nk = pl.num_programs(1)

    @pl.when(k == 0)
    def _init():
        m_sc[...] = jnp.full_like(m_sc, -1e30)
        l_sc[...] = jnp.zeros_like(l_sc)
        ws_sc[...] = jnp.zeros_like(ws_sc)
        wl_sc[...] = jnp.zeros_like(wl_sc)

    # MXU: anchor . contrast^T expressed directly (no transposed copy),
    # operands in input dtype, accumulate in f32.
    sim = jax.lax.dot_general(
        anchor_ref[...], contrast_ref[...],
        dimension_numbers=(((1,), (1,)), ((), ())),
        preferred_element_type=jnp.float32)              # [TA, TN] f32
    logits = sim * inv_temp

    # Validity + self-contrast masks built in-register (no [A,N] HBM mask).
    gr = i * block_a + jax.lax.broadcasted_iota(jnp.int32, (block_a, block_n), 0)
    gc = k * block_n + jax.lax.broadcasted_iota(jnp.int32, (block_a, block_n), 1)
    denom_ok = jnp.logical_and(gc < n_valid, gr != gc)   # bool [TA, TN]

    if explicit_mask:
        pos = jnp.where(denom_ok, mask_ref[...].astype(jnp.float32), 0.0)
    else:
        same = row_id_ref[...] == col_id_ref[...]        # [TA,1]==[1,TN] -> [TA,TN]
        pos = jnp.where(jnp.logical_and(denom_ok, same), 1.0, 0.0)

    # ---- online log-sum-exp over masked contrast columns ----
    masked_logits = jnp.where(denom_ok, logits, jnp.float32(-1e30))
    tile_max = jnp.max(masked_logits, axis=1, keepdims=True)
    m_prev = m_sc[...]
    m_new = jnp.maximum(m_prev, tile_max)
    alpha = jnp.exp(m_prev - m_new)
    # exp(-1e30 - m_new) underflows to exactly 0, so no extra select is needed
    # for the invalid columns.
    p = jnp.exp(masked_logits - m_new)
    l_sc[...] = l_sc[...] * alpha + jnp.sum(p, axis=1, keepdims=True)
    m_sc[...] = m_new

    # ---- similarity-weighted positives (no max-dependence -> no rescale) ----
    if pos_weight_mode == 'uniform':
        pw = pos
    elif pos_weight_mode == 'sim':
        pw = _int_pow(jnp.maximum(sim, 0.0), sim_power) * pos
    elif pos_weight_mode == 'hard':
        pw = _int_pow(jnp.maximum(1.0 - sim, 0.0), sim_power) * pos
    else:
        raise ValueError("pos_weight must be 'uniform', 'sim' or 'hard'")

    ws_sc[...] += jnp.sum(pw, axis=1, keepdims=True)
    wl_sc[...] += jnp.sum(pw * logits, axis=1, keepdims=True)

    @pl.when(k == nk - 1)
    def _finalize():
        lse = m_sc[...] + jnp.log(l_sc[...])
        ws = ws_sc[...]
        # sum(pw * log_prob) = sum(pw*logits) - lse * sum(pw).
        # Exact divide: runs once per anchor row; negligible vs the matmul.
        wlp = (wl_sc[...] - lse * ws) / (ws + 1e-12)
        loss_ref[...] = -wlp                              # per-anchor loss [TA,1]


# ------------------------------ JAX wrapper ---------------------------------
def _choose_tiles(A, N, block_a, block_n):
    # Conservative defaults (256 x 512) fit the 16/32 MiB scoped-VMEM default
    # on v5e/v6e/v7x with double-buffering to spare.
    if block_a is None:
        block_a = 256 if A > 256 else _round_up(A, 8)
    block_a = _round_up(int(block_a), 8)
    if block_n is None:
        block_n = 512 if N > 512 else _round_up(N, 128)
    block_n = _round_up(int(block_n), 128)
    a_pad = _round_up(A, block_a)
    n_pad = _round_up(N, block_n)
    return block_a, block_n, a_pad, n_pad


def supcon_loss_weighted(features, labels=None, mask=None, *,
                         temperature=0.07, contrast_mode='all',
                         pos_weight='sim', sim_power=1.0,
                         block_a=None, block_n=None):
    if features.ndim < 3:
        raise ValueError('`features` must be [B, V, ...]')
    features = features.reshape(features.shape[0], features.shape[1], -1)
    B, V, D = features.shape
    if labels is not None and mask is not None:
        raise ValueError('Cannot define both `labels` and `mask`')
    if pos_weight not in ('uniform', 'sim', 'hard'):
        raise ValueError("pos_weight must be 'uniform', 'sim' or 'hard'")

    # contrast_feature: row index = view * B + sample
    contrast = jnp.transpose(features, (1, 0, 2)).reshape(V * B, D)
    if contrast_mode == 'one':
        anchor = features[:, 0]
        anchor_count = 1
    elif contrast_mode == 'all':
        anchor = contrast
        anchor_count = V
    else:
        raise ValueError(f'Unknown mode: {contrast_mode}')

    A = anchor_count * B
    N = V * B
    TA, TN, A_pad, N_pad = _choose_tiles(A, N, block_a, block_n)

    # Zero-pad feature rows so padded tiles stay finite; padded anchor rows are
    # dropped before the mean, padded contrast columns are masked in-kernel.
    anchor_p = jnp.pad(anchor, ((0, A_pad - A), (0, 0)))
    contrast_p = jnp.pad(contrast, ((0, N_pad - N), (0, 0)))

    explicit_mask = mask is not None
    if explicit_mask:
        # TODO(synk): the explicit `mask=` path still streams a tiled [A, N]
        # mask from HBM (rare path); labels / None paths build it in-kernel.
        full = jnp.tile(mask.astype(jnp.float32), (anchor_count, V))
        full = jnp.pad(full, ((0, A_pad - A), (0, N_pad - N)))
        mask_inputs = (full,)
        mask_specs = [pl.BlockSpec((TA, TN), lambda i, k: (i, k))]
    else:
        if labels is not None:
            ids = labels.reshape(-1).astype(jnp.int32)          # [B]
        else:
            ids = jnp.arange(B, dtype=jnp.int32)                # eye(B) mask
        col_ids = jnp.tile(ids, V)                              # [N]
        row_ids = col_ids if contrast_mode == 'all' else ids    # [A]
        row_ids = jnp.pad(row_ids, (0, A_pad - A)).reshape(A_pad, 1)
        col_ids = jnp.pad(col_ids, (0, N_pad - N)).reshape(1, N_pad)
        mask_inputs = (row_ids, col_ids)
        mask_specs = [pl.BlockSpec((TA, 1), lambda i, k: (i, 0)),
                      pl.BlockSpec((1, TN), lambda i, k: (0, k))]

    grid = (A_pad // TA, N_pad // TN)

    kern = functools.partial(
        _supcon_kernel,
        block_a=TA, block_n=TN,
        inv_temp=1.0 / float(temperature),
        n_valid=N,
        pos_weight_mode=pos_weight,
        sim_power=float(sim_power),
        explicit_mask=explicit_mask)

    item = anchor_p.dtype.itemsize
    cost = pl.CostEstimate(
        flops=2 * A_pad * N_pad * D,
        transcendentals=A_pad * N_pad + 2 * A_pad,
        bytes_accessed=int((A_pad * D + (A_pad // TA) * N_pad * D) * item
                           + (A_pad + N_pad) * 4 + A_pad * 4))

    per_anchor = pl.pallas_call(
        kern,
        out_shape=jax.ShapeDtypeStruct((A_pad, 1), jnp.float32),
        grid_spec=pltpu.PrefetchScalarGridSpec(
            num_scalar_prefetch=0,
            grid=grid,
            in_specs=mask_specs + [
                pl.BlockSpec((TA, D), lambda i, k: (i, 0)),
                pl.BlockSpec((TN, D), lambda i, k: (k, 0)),
            ],
            out_specs=pl.BlockSpec((TA, 1), lambda i, k: (i, 0)),
            scratch_shapes=[pltpu.VMEM((TA, 1), jnp.float32),
                            pltpu.VMEM((TA, 1), jnp.float32),
                            pltpu.VMEM((TA, 1), jnp.float32),
                            pltpu.VMEM((TA, 1), jnp.float32)]),
        compiler_params=pltpu.CompilerParams(
            dimension_semantics=("parallel", "arbitrary")),
        cost_estimate=cost,
    )(*mask_inputs, anchor_p, contrast_p)

    # loss.view(anchor_count, B).mean() == mean over all A real anchor rows.
    return jnp.mean(per_anchor[:A, 0])


# --------------------------- pure-JAX reference ------------------------------
def _reference(features, labels=None, mask=None, *, temperature=0.07,
               contrast_mode='all', pos_weight='sim', sim_power=1.0):
    features = features.reshape(features.shape[0], features.shape[1], -1)
    B, V, D = features.shape
    if mask is not None:
        base = mask.astype(jnp.float32)
    elif labels is not None:
        lab = labels.reshape(-1, 1)
        base = (lab == lab.T).astype(jnp.float32)
    else:
        base = jnp.eye(B, dtype=jnp.float32)
    contrast = jnp.transpose(features, (1, 0, 2)).reshape(V * B, D)
    anchor = contrast if contrast_mode == 'all' else features[:, 0]
    anchor_count = V if contrast_mode == 'all' else 1
    A, N = anchor_count * B, V * B
    sim = anchor @ contrast.T
    logits = sim / temperature
    logits = logits - jnp.max(logits, axis=1, keepdims=True)
    full = jnp.tile(base, (anchor_count, V))
    lmask = 1.0 - jnp.eye(A, N, dtype=jnp.float32)
    full = full * lmask
    exp_l = jnp.exp(logits) * lmask
    log_prob = logits - jnp.log(jnp.sum(exp_l, axis=1, keepdims=True))
    if pos_weight == 'sim':
        pw = jnp.maximum(sim, 0.0) ** sim_power * full
    elif pos_weight == 'hard':
        pw = jnp.maximum(1.0 - sim, 0.0) ** sim_power * full
    else:
        pw = full
    ws = jnp.sum(pw, axis=1, keepdims=True) + 1e-12
    wlp = jnp.sum(pw * log_prob, axis=1, keepdims=True) / ws
    return jnp.mean(-wlp)


# --------------------------------- main --------------------------------------
if __name__ == "__main__":
    key = jax.random.PRNGKey(0)
    k1, k2, k3, k4, k5 = jax.random.split(key, 5)

    def _norm(x):
        return x / jnp.linalg.norm(x, axis=-1, keepdims=True)

    # Case 1: labels, contrast_mode='all', pos_weight='sim' (single-tile path).
    feats = _norm(jax.random.normal(k1, (8, 2, 128), jnp.float32))
    labels = jnp.array([0, 0, 1, 1, 2, 2, 3, 3], jnp.int32)
    got = jax.block_until_ready(
        supcon_loss_weighted(feats, labels, temperature=0.07,
                             contrast_mode='all', pos_weight='sim',
                             sim_power=1.0))
    want = _reference(feats, labels=labels, temperature=0.07,
                      contrast_mode='all', pos_weight='sim', sim_power=1.0)
    assert jnp.allclose(got, want, rtol=1e-4, atol=1e-5), ("case1", got, want)

    # Case 2: eye mask, 'hard', sim_power=2, mode='one', forced small row tiles
    # (exercises multiple anchor tiles + row/column padding).
    feats2 = _norm(jax.random.normal(k2, (40, 2, 64), jnp.float32))
    got2 = jax.block_until_ready(
        supcon_loss_weighted(feats2, temperature=0.1, contrast_mode='one',
                             pos_weight='hard', sim_power=2.0,
                             block_a=32, block_n=128))
    want2 = _reference(feats2, temperature=0.1, contrast_mode='one',
                       pos_weight='hard', sim_power=2.0)
    assert jnp.allclose(got2, want2, rtol=1e-4, atol=1e-5), ("case2", got2, want2)

    # Case 3: labels, multiple contrast tiles (online LSE across k) + padding.
    feats3 = _norm(jax.random.normal(k3, (96, 2, 64), jnp.float32))
    labels3 = jax.random.randint(k4, (96,), 0, 6).astype(jnp.int32)
    got3 = jax.block_until_ready(
        supcon_loss_weighted(feats3, labels3, temperature=0.07,
                             contrast_mode='all', pos_weight='uniform',
                             block_a=64, block_n=128))
    want3 = _reference(feats3, labels=labels3, temperature=0.07,
                       contrast_mode='all', pos_weight='uniform')
    assert jnp.allclose(got3, want3, rtol=1e-4, atol=1e-5), ("case3", got3, want3)

    # Case 4: explicit user mask path.
    feats4 = _norm(jax.random.normal(k5, (12, 2, 32), jnp.float32))
    user_mask = (jax.random.uniform(k4, (12, 12)) > 0.5).astype(jnp.float32)
    user_mask = jnp.maximum(user_mask, jnp.eye(12, dtype=jnp.float32))
    got4 = jax.block_until_ready(
        supcon_loss_weighted(feats4, mask=user_mask, temperature=0.07,
                             contrast_mode='all', pos_weight='sim',
                             sim_power=1.0))
    want4 = _reference(feats4, mask=user_mask, temperature=0.07,
                       contrast_mode='all', pos_weight='sim', sim_power=1.0)
    assert jnp.allclose(got4, want4, rtol=1e-4, atol=1e-5), ("case4", got4, want4)

    print("KERNEL_OK")
</pallas_src>

<mosaic_0001>
module attributes {stable_mosaic.version = 11 : i64} {
  func.func @_supcon_kernel(%arg0: i32, %arg1: i32, %arg2: memref<16x1xi32, #tpu.memory_space<vmem>>, %arg3: memref<1x128xi32, #tpu.memory_space<vmem>>, %arg4: memref<16x128xf32, #tpu.memory_space<vmem>>, %arg5: memref<128x128xf32, #tpu.memory_space<vmem>>, %arg6: memref<16x1xf32, #tpu.memory_space<vmem>>, %arg7: memref<16x1xf32, #tpu.memory_space<vmem>>, %arg8: memref<16x1xf32, #tpu.memory_space<vmem>>, %arg9: memref<16x1xf32, #tpu.memory_space<vmem>>, %arg10: memref<16x1xf32, #tpu.memory_space<vmem>>) attributes {dimension_semantics = [#tpu.dimension_semantics<parallel>, #tpu.dimension_semantics<arbitrary>], iteration_bounds = array<i64: 1, 1>, scalar_prefetch = 0 : i64, scratch_operands = 4 : i64, tpu.core_type = #tpu.core_type<tc>, window_params = [{transform_indices = @transform_0, window_bounds = array<i64: 16, 1>}, {transform_indices = @transform_1, window_bounds = array<i64: 1, 128>}, {transform_indices = @transform_2, window_bounds = array<i64: 16, 128>}, {transform_indices = @transform_3, window_bounds = array<i64: 128, 128>}, {transform_indices = @transform_4, window_bounds = array<i64: 16, 1>}]} {
    %c0_i32 = arith.constant 0 : i32
    %0 = arith.cmpi eq, %arg1, %c0_i32 : i32
    %1 = arith.extui %0 : i1 to i32
    %c0_i32_0 = arith.constant 0 : i32
    %2 = arith.cmpi ne, %1, %c0_i32_0 : i32
    scf.if %2 {
      %cst_36 = arith.constant -1.000000e+30 : f32
      %64 = vector.broadcast %cst_36 : f32 to vector<16x1xf32>
      %c0_37 = arith.constant 0 : index
      %c0_38 = arith.constant 0 : index
      %65 = vector.load %arg7[%c0_37, %c0_38] : memref<16x1xf32, #tpu.memory_space<vmem>>, vector<16x1xf32>
      tpu.vector_store %arg7[%c0_37, %c0_38], %64 {strides = array<i32>} : memref<16x1xf32, #tpu.memory_space<vmem>>, vector<16x1xf32>,
      %cst_39 = arith.constant 0.000000e+00 : f32
      %66 = vector.broadcast %cst_39 : f32 to vector<16x1xf32>
      %c0_40 = arith.constant 0 : index
      %c0_41 = arith.constant 0 : index
      %67 = vector.load %arg8[%c0_40, %c0_41] : memref<16x1xf32, #tpu.memory_space<vmem>>, vector<16x1xf32>
      tpu.vector_store %arg8[%c0_40, %c0_41], %66 {strides = array<i32>} : memref<16x1xf32, #tpu.memory_space<vmem>>, vector<16x1xf32>,
      %cst_42 = arith.constant 0.000000e+00 : f32
      %68 = vector.broadcast %cst_42 : f32 to vector<16x1xf32>
      %c0_43 = arith.constant 0 : index
      %c0_44 = arith.constant 0 : index
      %69 = vector.load %arg9[%c0_43, %c0_44] : memref<16x1xf32, #tpu.memory_space<vmem>>, vector<16x1xf32>
      tpu.vector_store %arg9[%c0_43, %c0_44], %68 {strides = array<i32>} : memref<16x1xf32, #tpu.memory_space<vmem>>, vector<16x1xf32>,
      %cst_45 = arith.constant 0.000000e+00 : f32
      %70 = vector.broadcast %cst_45 : f32 to vector<16x1xf32>
      %c0_46 = arith.constant 0 : index
      %c0_47 = arith.constant 0 : index
      %71 = vector.load %arg10[%c0_46, %c0_47] : memref<16x1xf32, #tpu.memory_space<vmem>>, vector<16x1xf32>
      tpu.vector_store %arg10[%c0_46, %c0_47], %70 {strides = array<i32>} : memref<16x1xf32, #tpu.memory_space<vmem>>, vector<16x1xf32>,
    } else {
    }
    %c0 = arith.constant 0 : index
    %c0_1 = arith.constant 0 : index
    %3 = vector.load %arg4[%c0, %c0_1] : memref<16x128xf32, #tpu.memory_space<vmem>>, vector<16x128xf32>
    %c0_2 = arith.constant 0 : index
    %c0_3 = arith.constant 0 : index
    %4 = vector.load %arg5[%c0_2, %c0_3] : memref<128x128xf32, #tpu.memory_space<vmem>>, vector<128x128xf32>
    %cst = arith.constant dense<0.000000e+00> : vector<16x128xf32>
    %5 = tpu.matmul %3, %4, %cst {dimension_numbers = #tpu.dot_dimension_numbers<[1], [1], [0], [0], [0, 0, 1, 0], [], []>} : vector<16x128xf32>, vector<128x128xf32>, vector<16x128xf32> -> vector<16x128xf32>
    %cst_4 = arith.constant 14.2857141 : f32
    %6 = vector.broadcast %cst_4 : f32 to vector<16x128xf32>
    %7 = arith.mulf %5, %6 : vector<16x128xf32>
    %c16_i32 = arith.constant 16 : i32
    %8 = arith.muli %arg0, %c16_i32 : i32
    %9 = tpu.iota {dimensions = array<i32: 0>} : vector<16x128xi32>
    %10 = vector.broadcast %8 : i32 to vector<16x128xi32>
    %11 = arith.addi %10, %9 : vector<16x128xi32>
    %c128_i32 = arith.constant 128 : i32
    %12 = arith.muli %arg1, %c128_i32 : i32
    %13 = tpu.iota {dimensions = array<i32: 1>} : vector<16x128xi32>
    %14 = vector.broadcast %12 : i32 to vector<16x128xi32>
    %15 = arith.addi %14, %13 : vector<16x128xi32>
    %c16_i32_5 = arith.constant 16 : i32
    %16 = vector.broadcast %c16_i32_5 : i32 to vector<16x128xi32>
    %17 = arith.cmpi slt, %15, %16 : vector<16x128xi32>
    %18 = arith.cmpi ne, %11, %15 : vector<16x128xi32>
    %19 = arith.andi %17, %18 : vector<16x128xi1>
    %c0_6 = arith.constant 0 : index
    %c0_7 = arith.constant 0 : index
    %20 = vector.load %arg2[%c0_6, %c0_7] : memref<16x1xi32, #tpu.memory_space<vmem>>, vector<16x1xi32>
    %c0_8 = arith.constant 0 : index
    %c0_9 = arith.constant 0 : index
    %21 = vector.load %arg3[%c0_8, %c0_9] : memref<1x128xi32, #tpu.memory_space<vmem>>, vector<1x128xi32>
    %22 = vector.broadcast %20 : vector<16x1xi32> to vector<16x128xi32>
    %23 = vector.broadcast %21 : vector<1x128xi32> to vector<16x128xi32>
    %24 = arith.cmpi eq, %22, %23 : vector<16x128xi32>
    %25 = arith.andi %19, %24 : vector<16x128xi1>
    %cst_10 = arith.constant 1.000000e+00 : f32
    %cst_11 = arith.constant 0.000000e+00 : f32
    %26 = vector.broadcast %cst_10 : f32 to vector<16x128xf32>
    %27 = vector.broadcast %cst_11 : f32 to vector<16x128xf32>
    %28 = arith.select %25, %26, %27 : vector<16x128xi1>, vector<16x128xf32>
    %cst_12 = arith.constant -1.000000e+30 : f32
    %29 = vector.broadcast %cst_12 : f32 to vector<16x128xf32>
    %30 = arith.select %19, %7, %29 : vector<16x128xi1>, vector<16x128xf32>
    %cst_13 = arith.constant dense<0xFF800000> : vector<16xf32>
    %31 = vector.multi_reduction <maximumf>, %30, %cst_13 [1] : vector<16x128xf32> to vector<16xf32>
    %32 = vector.shape_cast %31 : vector<16xf32> to vector<16x1xf32>
    %c0_14 = arith.constant 0 : index
    %c0_15 = arith.constant 0 : index
    %33 = vector.load %arg7[%c0_14, %c0_15] : memref<16x1xf32, #tpu.memory_space<vmem>>, vector<16x1xf32>
    %34 = arith.maximumf %33, %32 : vector<16x1xf32>
    %35 = arith.subf %33, %34 : vector<16x1xf32>
    %36 = math.exp %35 : vector<16x1xf32>
    %37 = vector.broadcast %34 : vector<16x1xf32> to vector<16x128xf32>
    %38 = arith.subf %30, %37 : vector<16x128xf32>
    %39 = math.exp %38 : vector<16x128xf32>
    %c0_16 = arith.constant 0 : index
    %c0_17 = arith.constant 0 : index
    %40 = vector.load %arg8[%c0_16, %c0_17] : memref<16x1xf32, #tpu.memory_space<vmem>>, vector<16x1xf32>
    %41 = arith.mulf %40, %36 : vector<16x1xf32>
    %cst_18 = arith.constant dense<0.000000e+00> : vector<16xf32>
    %42 = vector.multi_reduction <add>, %39, %cst_18 [1] : vector<16x128xf32> to vector<16xf32>
    %43 = vector.shape_cast %42 : vector<16xf32> to vector<16x1xf32>
    %44 = arith.addf %41, %43 : vector<16x1xf32>
    %c0_19 = arith.constant 0 : index
    %c0_20 = arith.constant 0 : index
    %45 = vector.load %arg8[%c0_19, %c0_20] : memref<16x1xf32, #tpu.memory_space<vmem>>, vector<16x1xf32>
    tpu.vector_store %arg8[%c0_19, %c0_20], %44 {strides = array<i32>} : memref<16x1xf32, #tpu.memory_space<vmem>>, vector<16x1xf32>,
    %c0_21 = arith.constant 0 : index
    %c0_22 = arith.constant 0 : index
    %46 = vector.load %arg7[%c0_21, %c0_22] : memref<16x1xf32, #tpu.memory_space<vmem>>, vector<16x1xf32>
    tpu.vector_store %arg7[%c0_21, %c0_22], %34 {strides = array<i32>} : memref<16x1xf32, #tpu.memory_space<vmem>>, vector<16x1xf32>,
    %cst_23 = arith.constant 0.000000e+00 : f32
    %47 = vector.broadcast %cst_23 : f32 to vector<16x128xf32>
    %48 = arith.maximumf %5, %47 : vector<16x128xf32>
    %49 = arith.mulf %48, %28 : vector<16x128xf32>
    %c0_24 = arith.constant 0 : index
    %c0_25 = arith.constant 0 : index
    %50 = vector.load %arg9[%c0_24, %c0_25] : memref<16x1xf32, #tpu.memory_space<vmem>>, vector<16x1xf32>
    %cst_26 = arith.constant dense<0.000000e+00> : vector<16xf32>
    %51 = vector.multi_reduction <add>, %49, %cst_26 [1] : vector<16x128xf32> to vector<16xf32>
    %52 = vector.shape_cast %51 : vector<16xf32> to vector<16x1xf32>
    %53 = arith.addf %50, %52 : vector<16x1xf32>
    %c0_27 = arith.constant 0 : index
    %c0_28 = arith.constant 0 : index
    %54 = vector.load %arg9[%c0_27, %c0_28] : memref<16x1xf32, #tpu.memory_space<vmem>>, vector<16x1xf32>
    tpu.vector_store %arg9[%c0_27, %c0_28], %53 {strides = array<i32>} : memref<16x1xf32, #tpu.memory_space<vmem>>, vector<16x1xf32>,
    %c0_29 = arith.constant 0 : index
    %c0_30 = arith.constant 0 : index
    %55 = vector.load %arg10[%c0_29, %c0_30] : memref<16x1xf32, #tpu.memory_space<vmem>>, vector<16x1xf32>
    %56 = arith.mulf %49, %7 : vector<16x128xf32>
    %cst_31 = arith.constant dense<0.000000e+00> : vector<16xf32>
    %57 = vector.multi_reduction <add>, %56, %cst_31 [1] : vector<16x128xf32> to vector<16xf32>
    %58 = vector.shape_cast %57 : vector<16xf32> to vector<16x1xf32>
    %59 = arith.addf %55, %58 : vector<16x1xf32>
    %c0_32 = arith.constant 0 : index
    %c0_33 = arith.constant 0 : index
    %60 = vector.load %arg10[%c0_32, %c0_33] : memref<16x1xf32, #tpu.memory_space<vmem>>, vector<16x1xf32>
    tpu.vector_store %arg10[%c0_32, %c0_33], %59 {strides = array<i32>} : memref<16x1xf32, #tpu.memory_space<vmem>>, vector<16x1xf32>,
    %c0_i32_34 = arith.constant 0 : i32
    %61 = arith.cmpi eq, %arg1, %c0_i32_34 : i32
    %62 = arith.extui %61 : i1 to i32
    %c0_i32_35 = arith.constant 0 : i32
    %63 = arith.cmpi ne, %62, %c0_i32_35 : i32
    scf.if %63 {
      %c0_36 = arith.constant 0 : index
      %c0_37 = arith.constant 0 : index
      %64 = vector.load %arg7[%c0_36, %c0_37] : memref<16x1xf32, #tpu.memory_space<vmem>>, vector<16x1xf32>
      %c0_38 = arith.constant 0 : index
      %c0_39 = arith.constant 0 : index
      %65 = vector.load %arg8[%c0_38, %c0_39] : memref<16x1xf32, #tpu.memory_space<vmem>>, vector<16x1xf32>
      %66 = math.log %65 : vector<16x1xf32>
      %67 = arith.addf %64, %66 : vector<16x1xf32>
      %c0_40 = arith.constant 0 : index
      %c0_41 = arith.constant 0 : index
      %68 = vector.load %arg9[%c0_40, %c0_41] : memref<16x1xf32, #tpu.memory_space<vmem>>, vector<16x1xf32>
      %c0_42 = arith.constant 0 : index
      %c0_43 = arith.constant 0 : index
      %69 = vector.load %arg10[%c0_42, %c0_43] : memref<16x1xf32, #tpu.memory_space<vmem>>, vector<16x1xf32>
      %70 = arith.mulf %67, %68 : vector<16x1xf32>
      %71 = arith.subf %69, %70 : vector<16x1xf32>
      %cst_44 = arith.constant 9.99999996E-13 : f32
      %72 = vector.broadcast %cst_44 : f32 to vector<16x1xf32>
      %73 = arith.addf %68, %72 : vector<16x1xf32>
      %74 = arith.divf %71, %73 : vector<16x1xf32>
      %cst_45 = arith.constant 0.000000e+00 : f32
      %75 = vector.broadcast %cst_45 : f32 to vector<16x1xf32>
      %76 = arith.subf %75, %74 : vector<16x1xf32>
      %c0_46 = arith.constant 0 : index
      %c0_47 = arith.constant 0 : index
      %77 = vector.load %arg6[%c0_46, %c0_47] : memref<16x1xf32, #tpu.memory_space<vmem>>, vector<16x1xf32>
      tpu.vector_store %arg6[%c0_46, %c0_47], %76 {strides = array<i32>} : memref<16x1xf32, #tpu.memory_space<vmem>>, vector<16x1xf32>,
    } else {
    }
    return
  }
  func.func @transform_0(%arg0: i32, %arg1: i32) -> (i32, i32) {
    %c0_i32 = arith.constant 0 : i32
    %c0_i32_0 = arith.constant 0 : i32
    return %arg0, %c0_i32 : i32, i32
  }
  func.func @transform_1(%arg0: i32, %arg1: i32) -> (i32, i32) {
    %c0_i32 = arith.constant 0 : i32
    %c0_i32_0 = arith.constant 0 : i32
    return %c0_i32, %arg1 : i32, i32
  }
  func.func @transform_2(%arg0: i32, %arg1: i32) -> (i32, i32) {
    %c0_i32 = arith.constant 0 : i32
    %c0_i32_0 = arith.constant 0 : i32
    return %arg0, %c0_i32 : i32, i32
  }
  func.func @transform_3(%arg0: i32, %arg1: i32) -> (i32, i32) {
    %c0_i32 = arith.constant 0 : i32
    %c0_i32_0 = arith.constant 0 : i32
    return %arg1, %c0_i32 : i32, i32
  }
  func.func @transform_4(%arg0: i32, %arg1: i32) -> (i32, i32) {
    %c0_i32 = arith.constant 0 : i32
    %c0_i32_0 = arith.constant 0 : i32
    return %arg0, %c0_i32 : i32, i32
  }
}

</mosaic_0001>

<llo_original>
// kernel: tpu_custom_call.1
$region0: #{tpu_custom_call.1}
  #allocation0 [shape = 'u32[]', space=smem, size = 0x4, offset = 0x4, fixed_abs, tag = 'smem constant byte address 0x4 - core index']
  #allocation1 [shape = 'u32[144,128]{1,0:T(1,128)}', space=vmem, size = 0x12000, scoped, tag = 'internal scratch']
  #allocation2 [shape = 'f32[16,1]{1,0:T(8,128)}', space=vmem, size = 0x2000, scoped, tag = 'scratch operand']
  #allocation3 [shape = 'f32[16,1]{1,0:T(8,128)}', space=vmem, size = 0x2000, scoped, tag = 'scratch operand']
  #allocation4 [shape = 'f32[16,1]{1,0:T(8,128)}', space=vmem, size = 0x2000, scoped, tag = 'scratch operand']
  #allocation5 [shape = 'f32[16,1]{1,0:T(8,128)}', space=vmem, size = 0x2000, scoped, tag = 'scratch operand']
  %s0 = inlined_call_operand.vmem [shape: s32[16,1], index: 0, kind: input, shape index: {}]
  %s1 = inlined_call_operand.vmem [shape: s32[1,128], index: 1, kind: input, shape index: {}]
  %s2 = inlined_call_operand.vmem [shape: f32[16,128], index: 2, kind: input, shape index: {}]
  %s3 = inlined_call_operand.hbm [shape: f32[128,128], index: 3, kind: input, shape index: {}]
  %s4 = inlined_call_operand.vmem [shape: f32[16,1], index: 4, kind: output, shape index: {}]
  %s5 = sld [smem:[#allocation0]]
  $region38: #{tpu_custom_call.1} parent=0
    _
  %s7 = ssub.s32 1, %s5
  %s8 = scalar_select 0, %s7, %s5
  $region1: #{tpu_custom_call.1} parent=0
    #allocation6 [shape = 'u8[65536]{0}', space=vmem, size = 0x10000, scoped, tag = 'input window, operand 3, single buffered']
    #allocation7 [shape = 's32[1]{0}', space=sflag, size = 0x4, scoped, tag = 'scoped memory for tpu_custom_call.1']
    %9 = vsyncpa [#allocation7], 0
    // Predicated region
    $region2: #{tpu_custom_call.1} parent=1 // pred_check
      _
    $region3: #{tpu_custom_call.1} parent=1 // pred_check_branch
      %11 = sbr.rel (0) target = $region5
    $region4: #{tpu_custom_call.1} parent=1 // pred_region
      _
    $region5: #{tpu_custom_call.1} parent=1 // pred_fallthru
      _
    // Predicated region
    $region6: #{tpu_custom_call.1} parent=1 // pred_check
      _
    $region7: #{tpu_custom_call.1} parent=1 // pred_check_branch
      %13 = sbr.rel (0) target = $region9
    $region8: #{tpu_custom_call.1} parent=1 // pred_region
      _
    $region9: #{tpu_custom_call.1} parent=1 // pred_fallthru
      _
    // Predicated region
    $region10: #{tpu_custom_call.1} parent=1 // pred_check
      _
    $region11: #{tpu_custom_call.1} parent=1 // pred_check_branch
      %15 = sbr.rel (0) target = $region13
    $region12: #{tpu_custom_call.1} parent=1 // pred_region
      _
    $region13: #{tpu_custom_call.1} parent=1 // pred_fallthru
      _
    // Predicated region
    $region14: #{tpu_custom_call.1} parent=1 // pred_check
      _
    $region15: #{tpu_custom_call.1} parent=1 // pred_check_branch
      %17 = sbr.rel (0) target = $region17
    $region16: #{tpu_custom_call.1} parent=1 // pred_region
      %s19 = ssub.s32 2048, 2048
      %20 = vsyncadd [#allocation7], %s19
      %s21 = sshll.u32 [#allocation6], 4
      %s22 = int_to_ptr.vmem [resolvable:$true] %s21
      %27 = dma.hbm_to_vmem [thread:$0]  %s3, 2048, %s22, [#allocation7], 128, 128, 8
    $region17: #{tpu_custom_call.1} parent=1 // pred_fallthru
      _
    // Predicated region
    $region18: #{tpu_custom_call.1} parent=1 // pred_check
      _
    $region19: #{tpu_custom_call.1} parent=1 // pred_check_branch
      %29 = sbr.rel (0) target = $region21
    $region20: #{tpu_custom_call.1} parent=1 // pred_region
      %30 = dma.done [#allocation7], 2048
    $region21: #{tpu_custom_call.1} parent=1 // pred_fallthru
      _
    %p31 = scmp.eq.s32.totalorder 0, 0
    // Predicated region
    $region22: #{tpu_custom_call.1} parent=1 // pred_check
      %p32 = pneg %p31
    $region23: #{tpu_custom_call.1} parent=1 // pred_check_branch
      %34 = sbr.rel (%p32) target = $region25
    $region24: #{tpu_custom_call.1} parent=1 // pred_region
      %vm35 = vcmask 7168
      %36 = vst.msk [vmem:[#allocation2] sm:$0xff] %vm35, -1e+30
      %37 = vst.msk [vmem:[#allocation2 + $0x8] sm:$0xff] %vm35, -1e+30
      %38 = vst.msk [vmem:[#allocation3] sm:$0xff] %vm35, 0.0
      %39 = vst.msk [vmem:[#allocation3 + $0x8] sm:$0xff] %vm35, 0.0
      %40 = vst.msk [vmem:[#allocation4] sm:$0xff] %vm35, 0.0
      %41 = vst.msk [vmem:[#allocation4 + $0x8] sm:$0xff] %vm35, 0.0
      %42 = vst.msk [vmem:[#allocation5] sm:$0xff] %vm35, 0.0
      %43 = vst.msk [vmem:[#allocation5 + $0x8] sm:$0xff] %vm35, 0.0
    $region25: #{tpu_custom_call.1} parent=1 // pred_fallthru
      _
    %v44 = vld [vmem:[%s2] sm:$0xff]
    %v45 = vld [vmem:[%s2 + $0x8] sm:$0xff]
    %v46 = vld [vmem:[#allocation6] sm:$0xff]
    %v47 = vld [vmem:[#allocation6 + $0x8] sm:$0xff]
    %v48 = vld [vmem:[#allocation6 + $0x10] sm:$0xff]
    %v49 = vld [vmem:[#allocation6 + $0x18] sm:$0xff]
    %v50 = vld [vmem:[#allocation6 + $0x20] sm:$0xff]
    %v51 = vld [vmem:[#allocation6 + $0x28] sm:$0xff]
    %v52 = vld [vmem:[#allocation6 + $0x30] sm:$0xff]
    %v53 = vld [vmem:[#allocation6 + $0x38] sm:$0xff]
    %v54 = vld [vmem:[#allocation6 + $0x40] sm:$0xff]
    %v55 = vld [vmem:[#allocation6 + $0x48] sm:$0xff]
    %v56 = vld [vmem:[#allocation6 + $0x50] sm:$0xff]
    %v57 = vld [vmem:[#allocation6 + $0x58] sm:$0xff]
    %v58 = vld [vmem:[#allocation6 + $0x60] sm:$0xff]
    %v59 = vld [vmem:[#allocation6 + $0x68] sm:$0xff]
    %v60 = vld [vmem:[#allocation6 + $0x70] sm:$0xff]
    %v61 = vld [vmem:[#allocation6 + $0x78] sm:$0xff]
    %62 = vmatprep.subr.mxu0 0.0
    %63 = vmatpush1.xpose.msra.mxu0 %v46
    %64 = vmatprep.subr.mxu0 0.0
    %65 = vmatpush1.xpose.msra.mxu0 %v47
    %66 = vmatprep.subr.mxu0 0.0
    %67 = vmatpush1.xpose.msra.mxu0 %v48
    %68 = vmatprep.subr.mxu0 0.0
    %69 = vmatpush1.xpose.msra.mxu0 %v49
    %70 = vmatprep.subr.mxu0 0.0
    %71 = vmatpush1.xpose.msra.mxu0 %v50
    %72 = vmatprep.subr.mxu0 0.0
    %73 = vmatpush1.xpose.msra.mxu0 %v51
    %74 = vmatprep.subr.mxu0 0.0
    %75 = vmatpush1.xpose.msra.mxu0 %v52
    %76 = vmatprep.subr.mxu0 0.0
    %77 = vmatpush1.xpose.msra.mxu0 %v53
    %78 = vmatprep.subr.mxu0 0.0
    %79 = vmatpush1.xpose.msra.mxu0 %v54
    %80 = vmatprep.subr.mxu0 0.0
    %81 = vmatpush1.xpose.msra.mxu0 %v55
    %82 = vmatprep.subr.mxu0 0.0
    %83 = vmatpush1.xpose.msra.mxu0 %v56
    %84 = vmatprep.subr.mxu0 0.0
    %85 = vmatpush1.xpose.msra.mxu0 %v57
    %86 = vmatprep.subr.mxu0 0.0
    %87 = vmatpush1.xpose.msra.mxu0 %v58
    %88 = vmatprep.subr.mxu0 0.0
    %89 = vmatpush1.xpose.msra.mxu0 %v59
    %90 = vmatprep.subr.mxu0 0.0
    %91 = vmatpush1.xpose.msra.mxu0 %v60
    %92 = vmatprep.subr.mxu0 0.0
    %93 = vmatpush1.xpose.msra.mxu0 %v61
    %94 = vmatprep.subr.mxu0 0.0
    %95 = vmatpush1.xpose.msra.mxu0 0.0
    %96 = vmatprep.subr.mxu0 0.0
    %97 = vmatpush1.xpose.msra.mxu0 0.0
    %98 = vmatprep.subr.mxu0 0.0
    %99 = vmatpush1.xpose.msra.mxu0 0.0
    %100 = vmatprep.subr.mxu0 0.0
    %101 = vmatpush1.xpose.msra.mxu0 0.0
    %102 = vmatprep.subr.mxu0 0.0
    %103 = vmatpush1.xpose.msra.mxu0 0.0
    %104 = vmatprep.subr.mxu0 0.0
    %105 = vmatpush1.xpose.msra.mxu0 0.0
    %106 = vmatprep.subr.mxu0 0.0
    %107 = vmatpush1.xpose.msra.mxu0 0.0
    %108 = vmatprep.subr.mxu0 0.0
    %109 = vmatpush1.xpose.msra.mxu0 0.0
    %110 = vmatprep.subr.mxu0 0.0
    %111 = vmatpush1.xpose.msra.mxu0 0.0
    %112 = vmatprep.subr.mxu0 0.0
    %113 = vmatpush1.xpose.msra.mxu0 0.0
    %114 = vmatprep.subr.mxu0 0.0
    %115 = vmatpush1.xpose.msra.mxu0 0.0
    %116 = vmatprep.subr.mxu0 0.0
    %117 = vmatpush1.xpose.msra.mxu0 0.0
    %118 = vmatprep.subr.mxu0 0.0
    %119 = vmatpush1.xpose.msra.mxu0 0.0
    %120 = vmatprep.subr.mxu0 0.0
    %121 = vmatpush1.xpose.msra.mxu0 0.0
    %122 = vmatprep.subr.mxu0 0.0
    %123 = vmatpush1.xpose.msra.mxu0 0.0
    %124 = vmatprep.subr.mxu0 0.0
    %125 = vmatpush1.xpose.msra.mxu0 0.0
    %126 = vmatprep.mubr.f32.mxu0 0.0
    %127 = vmatmul.mubr.f32.gmra.mrb[0].mxu0 %v44
    %v128 = vpop.f32.mrb[0].mxu0
    %v129 = vadd.f32 0.0, %v128
    %v130 = vpop.f32.mrb[0].mxu0
    %131 = vmatprep.mubr.f32.mxu0 0.0
    %132 = vmatmul.mubr.f32.gmra.mrb[0].mxu0 %v45
    %v133 = vpop.f32.mrb[0].mxu0
    %v134 = vadd.f32 0.0, %v133
    %v135 = vpop.f32.mrb[0].mxu0
    %136 = vdwg.mxu0
    %v137 = vmul.f32 %v129, 14.285714
    %v138 = vmul.f32 %v134, 14.285714
    %s139 = smul.u32 0, 16
    %v140 = vlaneseq
    %v141 = vshrl.u32 %v140, 7
    %v142 = vadd.s32 %v141, 8
    %v143 = vstv %s139
    %v144 = vadd.s32 %v143, %v141
    %v145 = vadd.s32 %v143, %v142
    %s146 = smul.u32 0, 128
    %v147 = vlaneseq
    %v148 = vand.u32 %v147, 127
    %v149 = vstv %s146
    %v150 = vadd.s32 %v149, %v148
    %vm151 = vcmp.lt.s32.totalorder %v150, 16
    %vm152 = vcmp.ne.s32.totalorder %v144, %v150
    %vm153 = vcmp.ne.s32.totalorder %v145, %v150
    %vm154 = vmand %vm151, %vm152
    %vm155 = vmand %vm151, %vm153
    %v156 = vld [vmem:[%s0] sm:$0xff]
    %v157 = vld [vmem:[%s0 + $0x8] sm:$0xff]
    %v158 = vld [vmem:[%s1] sm:$0x1]
    %159 = vset.pattern.permute.xlu0 0
    %160 = vperm.xlu0 %159, %v156
    %v161 = vpop.permute.xlu0 %160
    %162 = vset.pattern.permute.xlu0 0
    %163 = vperm.xlu0 %162, %v157
    %v164 = vpop.permute.xlu0 %163
    %v165 = vlaneseq
    %v166 = vshrl.u32 %v165, 7
    %v167 = vsub.s32 0, %v166
    %v168 = vrot.slane %v158, %v167
    %vm169 = vcmp.eq.s32.totalorder %v161, %v168
    %vm170 = vcmp.eq.s32.totalorder %v164, %v168
    %vm171 = vmand %vm154, %vm169
    %vm172 = vmand %vm155, %vm170
    %v173 = vsel %vm171, 1.0, 0.0
    %v174 = vsel %vm172, 1.0, 0.0
    %v175 = vsel %vm154, %v137, -1e+30
    %v176 = vsel %vm155, %v138, -1e+30
    %177 = vmax.xlane.f32.xlu0 %v175
    %v178 = vpop.xlane.xlu0 %177
    %179 = vmax.xlane.f32.xlu0 %v176
    %v180 = vpop.xlane.xlu0 %179
    %v181 = vld [vmem:[#allocation2] sm:$0xff]
    %v182 = vld [vmem:[#allocation2 + $0x8] sm:$0xff]
    %v183 = vmax.f32 %v181, %v178
    %v184 = vmax.f32 %v182, %v180
    %v185 = vsub.f32 %v181, %v183
    %v186 = vsub.f32 %v182, %v184
    %v187 = vmul.f32 %v185, 1.442695
    %v188 = vpow.pop %v187
    %v189 = vmul.f32 %v186, 1.442695
    %v190 = vpow.pop %v189
    %192 = vset.pattern.permute.xlu0 0
    %193 = vperm.xlu0 %192, %v183
    %v194 = vpop.permute.xlu0 %193
    %197 = vset.pattern.permute.xlu0 0
    %198 = vperm.xlu0 %197, %v184
    %v199 = vpop.permute.xlu0 %198
    %v201 = vsub.f32 %v175, %v194
    %v202 = vsub.f32 %v176, %v199
    %v203 = vmul.f32 %v201, 1.442695
    %v204 = vpow.pop %v203
    %v205 = vmul.f32 %v202, 1.442695
    %v206 = vpow.pop %v205
    %v207 = vld [vmem:[#allocation3] sm:$0xff]
    %v208 = vld [vmem:[#allocation3 + $0x8] sm:$0xff]
    %v209 = vmul.f32 %v207, %v188
    %v210 = vmul.f32 %v208, %v190
    %211 = vadd.xlane.f32.xlu0 %v204
    %v212 = vpop.xlane.xlu0 %211
    %213 = vadd.xlane.f32.xlu0 %v206
    %v214 = vpop.xlane.xlu0 %213
    %v215 = vadd.f32 %v209, %v212
    %v216 = vadd.f32 %v210, %v214
    %vm217 = vcmask 7168
    %218 = vst.msk [vmem:[#allocation3] sm:$0xff] %vm217, %v215
    %219 = vst.msk [vmem:[#allocation3 + $0x8] sm:$0xff] %vm217, %v216
    %220 = vst.msk [vmem:[#allocation2] sm:$0xff] %vm217, %v183
    %221 = vst.msk [vmem:[#allocation2 + $0x8] sm:$0xff] %vm217, %v184
    %v222 = vmax.f32 %v129, 0.0
    %v223 = vmax.f32 %v134, 0.0
    %v224 = vmul.f32 %v222, %v173
    %v225 = vmul.f32 %v223, %v174
    %v226 = vld [vmem:[#allocation4] sm:$0xff]
    %v227 = vld [vmem:[#allocation4 + $0x8] sm:$0xff]
    %228 = vadd.xlane.f32.xlu0 %v224
    %v229 = vpop.xlane.xlu0 %228
    %230 = vadd.xlane.f32.xlu0 %v225
    %v231 = vpop.xlane.xlu0 %230
    %v232 = vadd.f32 %v226, %v229
    %v233 = vadd.f32 %v227, %v231
    %234 = vst.msk [vmem:[#allocation4] sm:$0xff] %vm217, %v232
    %235 = vst.msk [vmem:[#allocation4 + $0x8] sm:$0xff] %vm217, %v233
    %v236 = vld [vmem:[#allocation5] sm:$0xff]
    %v237 = vld [vmem:[#allocation5 + $0x8] sm:$0xff]
    %v238 = vmul.f32 %v224, %v137
    %v239 = vmul.f32 %v225, %v138
    %240 = vadd.xlane.f32.xlu0 %v238
    %v241 = vpop.xlane.xlu0 %240
    %242 = vadd.xlane.f32.xlu0 %v239
    %v243 = vpop.xlane.xlu0 %242
    %v244 = vadd.f32 %v236, %v241
    %v245 = vadd.f32 %v237, %v243
    %246 = vst.msk [vmem:[#allocation5] sm:$0xff] %vm217, %v244
    %247 = vst.msk [vmem:[#allocation5 + $0x8] sm:$0xff] %vm217, %v245
    // Predicated region
    $region26: #{tpu_custom_call.1} parent=1 // pred_check
      %p248 = pneg %p31
    $region27: #{tpu_custom_call.1} parent=1 // pred_check_branch
      %250 = sbr.rel (%p248) target = $region29
    $region28: #{tpu_custom_call.1} parent=1 // pred_region
      %v251 = vld [vmem:[#allocation2] sm:$0xff]
      %v252 = vld [vmem:[#allocation2 + $0x8] sm:$0xff]
      %v253 = vld [vmem:[#allocation3] sm:$0xff]
      %v254 = vld [vmem:[#allocation3 + $0x8] sm:$0xff]
      %v255 = vlog2.pop %v253
      %v256 = vmul.f32 %v255, 0.6931472
      %v257 = vlog2.pop %v254
      %v258 = vmul.f32 %v257, 0.6931472
      %v259 = vadd.f32 %v251, %v256
      %v260 = vadd.f32 %v252, %v258
      %v261 = vld [vmem:[#allocation4] sm:$0xff]
      %v262 = vld [vmem:[#allocation4 + $0x8] sm:$0xff]
      %v263 = vld [vmem:[#allocation5] sm:$0xff]
      %v264 = vld [vmem:[#allocation5 + $0x8] sm:$0xff]
      %v265 = vmul.f32 %v259, %v261
      %v266 = vmul.f32 %v260, %v262
      %v267 = vsub.f32 %v263, %v265
      %v268 = vsub.f32 %v264, %v266
      %v269 = vadd.f32 %v261, 1e-12
      %v270 = vadd.f32 %v262, 1e-12
      %v271 = vrcp.pop %v269
      %v272 = vmul.f32 %v267, %v271
      %v273 = vrcp.pop %v270
      %v274 = vmul.f32 %v268, %v273
      %v275 = vsub.f32 0.0, %v272
      %v276 = vsub.f32 0.0, %v274
      %277 = vst.msk [vmem:[%s4] sm:$0xff] %vm217, %v275
      %278 = vst.msk [vmem:[%s4 + $0x8] sm:$0xff] %vm217, %v276
    $region29: #{tpu_custom_call.1} parent=1 // pred_fallthru
      _
    // Predicated region
    $region30: #{tpu_custom_call.1} parent=1 // pred_check
      _
    $region31: #{tpu_custom_call.1} parent=1 // pred_check_branch
      %280 = sbr.rel (0) target = $region33
    $region32: #{tpu_custom_call.1} parent=1 // pred_region
      _
    $region33: #{tpu_custom_call.1} parent=1 // pred_fallthru
      _
    // Predicated region
    $region34: #{tpu_custom_call.1} parent=1 // pred_check
      _
    $region35: #{tpu_custom_call.1} parent=1 // pred_check_branch
      %282 = sbr.rel (0) target = $region37
    $region36: #{tpu_custom_call.1} parent=1 // pred_region
      _
    $region37: #{tpu_custom_call.1} parent=1 // pred_fallthru
      _
    %283 = vsyncpa [#allocation7], 1

</llo_original>
